<compile_context>
chip_gen: v7x
topology: tpu7x:2x2x1
jax: 0.10.0
libtpu: 0.0.40
codegen_flags: <defaults>
</compile_context>

<pallas_src>
import functools

import jax
import jax.numpy as jnp
from jax.experimental import pallas as pl
from jax.experimental.pallas import tpu as pltpu


def _round_up(x, m):
    return ((x + m - 1) // m) * m


def _choose_batch_tile(B, min_itemsize):
    """Largest batch tile (multiple of the native sublane tile) dividing B."""
    base = 8 * (4 // max(1, min(4, min_itemsize)))  # 8 for f32, 16 for bf16, 32 for i8
    for tb in (128, 64, 32, 16, 8):
        if tb % base == 0 and B % tb == 0:
            return tb
    return B  # block dim == full array dim is always legal


def _kl_reduce_kernel(*refs, elem_fn, n_valid, tile_n, inv_n, need_mask):
    """Grid = (batch blocks, feature blocks).  The output block index is constant
    along axis 1, so o_ref / acc_ref act as per-batch-block accumulators."""
    *in_refs, o_ref, acc_ref = refs
    j = pl.program_id(1)

    @pl.when(j == 0)
    def _():
        acc_ref[...] = jnp.zeros_like(acc_ref)

    vals = [r[...].astype(jnp.float32) for r in in_refs]
    kl = elem_fn(*vals)

    if need_mask:
        # Mask the ragged tail lanes (data past N is undefined padding).
        col = j * tile_n + jax.lax.broadcasted_iota(jnp.int32, kl.shape, 1)
        kl = jnp.where(col < n_valid, kl, 0.0)

    acc_ref[...] += kl  # lane-wide accumulate: pure VPU in steady state

    @pl.when(j == pl.num_programs(1) - 1)
    def _():
        # Single cross-lane (XLU) reduce + normalization, once per batch block.
        o_ref[...] = jnp.sum(acc_ref[...], axis=1, keepdims=True) * jnp.float32(inv_n)


def _per_sample_mean(elem_fn, arrays, *, tile_n=2048):
    """arrays: tuple of (B, N) arrays.  Returns (B,) f32 per-sample mean of elem_fn."""
    B, N = arrays[0].shape

    # Lane tile selection.
    tile_n_cap = max(128, (tile_n // 128) * 128)
    if N <= tile_n_cap:
        # Single feature block: block last dim == full array dim is always legal,
        # regardless of 128-divisibility, and no masking is needed.
        feat_tile = N
        need_mask = False
    else:
        feat_tile = tile_n_cap                  # multiple of 128
        need_mask = (N % feat_tile) != 0

    min_itemsize = min(a.dtype.itemsize for a in arrays)
    tb = _choose_batch_tile(B, min_itemsize)

    grid = (pl.cdiv(B, tb), pl.cdiv(N, feat_tile))

    kernel = functools.partial(
        _kl_reduce_kernel,
        elem_fn=elem_fn,
        n_valid=N,
        tile_n=feat_tile,
        inv_n=1.0 / float(N),
        need_mask=need_mask,
    )

    out = pl.pallas_call(
        kernel,
        out_shape=jax.ShapeDtypeStruct((B, 1), jnp.float32),
        grid_spec=pltpu.PrefetchScalarGridSpec(
            num_scalar_prefetch=0,
            grid=grid,
            in_specs=[pl.BlockSpec((tb, feat_tile), lambda i, j: (i, j))
                      for _ in arrays],
            out_specs=pl.BlockSpec((tb, 1), lambda i, j: (i, 0)),
            scratch_shapes=[pltpu.VMEM((tb, feat_tile), jnp.float32)],
        ),
        compiler_params=pltpu.CompilerParams(
            # batch blocks independent -> megacore-shardable; feature axis is the
            # sequential reduction.
            dimension_semantics=("parallel", "arbitrary"),
            # Worst case: 4 f32 inputs x 2 buffers x (128 x 2048) = 8 MiB + 1 MiB
            # scratch.  32 MiB raises v5e's 16 MiB default, safe on v6e/v7x.
            vmem_limit_bytes=32 * 1024 * 1024,
        ),
    )(*arrays)
    return out[:, 0]


# ---------------------------------------------------------------------------
# Elementwise KL formulas (traced inside the kernel, all math in f32).
# var is derived from logvar on the EUP instead of being streamed from HBM.
# ---------------------------------------------------------------------------
def _kl_vs_std_normal(mu, lv):
    var = jnp.exp(lv)
    return -0.5 * (1.0 + lv - mu * mu - var)


def _kl_between(mu1, lv1, mu2, lv2):
    v1 = jnp.exp(lv1)
    d = mu1 - mu2
    # (v1 + d^2) / v2  ==  (v1 + d^2) * exp(-lv2)   (single EUP op, no divide)
    return 0.5 * (lv2 - lv1 + (v1 + d * d) * jnp.exp(-lv2) - 1.0)


class Gaussian:
    """Minimal stand-in for flemme's Gaussian container: var = exp(logvar)."""

    def __init__(self, mean, logvar):
        self.mean = mean
        self.logvar = logvar
        self.var = jnp.exp(logvar)


def kl_loss_forward(gauss1, gauss2=None, *, reduction="mean", tile_n=2048):
    """JAX/Pallas equivalent of flemme KLLoss(reduction).forward(gauss1, gauss2)."""
    if gauss2 is None:
        arrays = (gauss1.mean, gauss1.logvar)
        elem_fn = _kl_vs_std_normal
    else:
        arrays = (gauss1.mean, gauss1.logvar, gauss2.mean, gauss2.logvar)
        elem_fn = _kl_between

    shape = arrays[0].shape
    if len(shape) <= 1:
        # TODO(synk): 0/1-D inputs never hit the per-sample reduction; plain-JAX path.
        res = elem_fn(*[a.astype(jnp.float32) for a in arrays])
    else:
        B = shape[0]
        N = 1
        for s in shape[1:]:
            N *= s
        arrays2d = [a.reshape(B, N) for a in arrays]
        res = _per_sample_mean(elem_fn, arrays2d, tile_n=tile_n)  # shape (B,)

    if reduction == "none":
        return res
    if reduction == "sum":
        return jnp.sum(res)
    if reduction == "mean":
        return jnp.mean(res)
    raise ValueError(f"unsupported reduction: {reduction!r}")


if __name__ == "__main__":
    key = jax.random.PRNGKey(0)
    k1, k2, k3, k4 = jax.random.split(key, 4)
    B, C, H, W = 2, 4, 16, 16

    g1 = Gaussian(jax.random.normal(k1, (B, C, H, W), jnp.float32),
                  0.1 * jax.random.normal(k2, (B, C, H, W), jnp.float32))
    g2 = Gaussian(jax.random.normal(k3, (B, C, H, W), jnp.float32),
                  0.1 * jax.random.normal(k4, (B, C, H, W), jnp.float32))

    # --- case 1: KL(g1 || N(0, I)), reduction='mean' ---
    out1 = jax.block_until_ready(kl_loss_forward(g1, None, reduction="mean"))
    ref1_elem = -0.5 * (1.0 + g1.logvar - g1.mean ** 2 - g1.var)
    ref1 = jnp.mean(jnp.mean(ref1_elem, axis=(1, 2, 3)))
    assert jnp.allclose(out1, ref1, rtol=1e-5, atol=1e-5), (out1, ref1)

    # --- case 2: KL(g1 || g2), reduction='mean' ---
    out2 = jax.block_until_ready(kl_loss_forward(g1, g2, reduction="mean"))
    ref2_elem = 0.5 * (g2.logvar - g1.logvar
                       + (g1.var + (g1.mean - g2.mean) ** 2) / g2.var - 1.0)
    ref2 = jnp.mean(jnp.mean(ref2_elem, axis=(1, 2, 3)))
    assert jnp.allclose(out2, ref2, rtol=1e-5, atol=1e-5), (out2, ref2)

    # --- reduction='none' path ---
    out3 = jax.block_until_ready(kl_loss_forward(g1, g2, reduction="none"))
    ref3 = jnp.mean(ref2_elem, axis=(1, 2, 3))
    assert jnp.allclose(out3, ref3, rtol=1e-5, atol=1e-5), (out3, ref3)

    # --- ragged feature axis + multi-step reduction (exercises the mask path) ---
    kb1, kb2 = jax.random.split(k1)
    g3 = Gaussian(jax.random.normal(kb1, (2, 3, 100), jnp.float32),
                  0.1 * jax.random.normal(kb2, (2, 3, 100), jnp.float32))
    out4 = jax.block_until_ready(kl_loss_forward(g3, None, reduction="sum", tile_n=128))
    ref4_elem = -0.5 * (1.0 + g3.logvar - g3.mean ** 2 - g3.var)
    ref4 = jnp.sum(jnp.mean(ref4_elem, axis=(1, 2)))
    assert jnp.allclose(out4, ref4, rtol=1e-5, atol=1e-5), (out4, ref4)

    print("KERNEL_OK")
</pallas_src>

<mosaic_0001>
module attributes {stable_mosaic.version = 11 : i64} {
  func.func @_kl_reduce_kernel(%arg0: i32, %arg1: i32, %arg2: memref<2x1024xf32, #tpu.memory_space<vmem>>, %arg3: memref<2x1024xf32, #tpu.memory_space<vmem>>, %arg4: memref<2x1xf32, #tpu.memory_space<vmem>>, %arg5: memref<2x1024xf32, #tpu.memory_space<vmem>>) attributes {dimension_semantics = [#tpu.dimension_semantics<parallel>, #tpu.dimension_semantics<arbitrary>], iteration_bounds = array<i64: 1, 1>, scalar_prefetch = 0 : i64, scratch_operands = 1 : i64, tpu.core_type = #tpu.core_type<tc>, window_params = [{transform_indices = @transform_0, window_bounds = array<i64: 2, 1024>}, {transform_indices = @transform_1, window_bounds = array<i64: 2, 1024>}, {transform_indices = @transform_2, window_bounds = array<i64: 2, 1>}]} {
    %c0_i32 = arith.constant 0 : i32
    %0 = arith.cmpi eq, %arg1, %c0_i32 : i32
    %1 = arith.extui %0 : i1 to i32
    %c0_i32_0 = arith.constant 0 : i32
    %2 = arith.cmpi ne, %1, %c0_i32_0 : i32
    scf.if %2 {
      %cst_11 = arith.constant 0.000000e+00 : f32
      %19 = vector.broadcast %cst_11 : f32 to vector<2x1024xf32>
      %c0_12 = arith.constant 0 : index
      %c0_13 = arith.constant 0 : index
      %20 = vector.load %arg5[%c0_12, %c0_13] : memref<2x1024xf32, #tpu.memory_space<vmem>>, vector<2x1024xf32>
      tpu.vector_store %arg5[%c0_12, %c0_13], %19 {strides = array<i32>} : memref<2x1024xf32, #tpu.memory_space<vmem>>, vector<2x1024xf32>,
    } else {
    }
    %c0 = arith.constant 0 : index
    %c0_1 = arith.constant 0 : index
    %3 = vector.load %arg2[%c0, %c0_1] : memref<2x1024xf32, #tpu.memory_space<vmem>>, vector<2x1024xf32>
    %c0_2 = arith.constant 0 : index
    %c0_3 = arith.constant 0 : index
    %4 = vector.load %arg3[%c0_2, %c0_3] : memref<2x1024xf32, #tpu.memory_space<vmem>>, vector<2x1024xf32>
    %5 = math.exp %4 : vector<2x1024xf32>
    %cst = arith.constant 1.000000e+00 : f32
    %6 = vector.broadcast %cst : f32 to vector<2x1024xf32>
    %7 = arith.addf %6, %4 : vector<2x1024xf32>
    %8 = arith.mulf %3, %3 : vector<2x1024xf32>
    %9 = arith.subf %7, %8 : vector<2x1024xf32>
    %10 = arith.subf %9, %5 : vector<2x1024xf32>
    %cst_4 = arith.constant -5.000000e-01 : f32
    %11 = vector.broadcast %cst_4 : f32 to vector<2x1024xf32>
    %12 = arith.mulf %11, %10 : vector<2x1024xf32>
    %c0_5 = arith.constant 0 : index
    %c0_6 = arith.constant 0 : index
    %13 = vector.load %arg5[%c0_5, %c0_6] : memref<2x1024xf32, #tpu.memory_space<vmem>>, vector<2x1024xf32>
    %14 = arith.addf %13, %12 : vector<2x1024xf32>
    %c0_7 = arith.constant 0 : index
    %c0_8 = arith.constant 0 : index
    %15 = vector.load %arg5[%c0_7, %c0_8] : memref<2x1024xf32, #tpu.memory_space<vmem>>, vector<2x1024xf32>
    tpu.vector_store %arg5[%c0_7, %c0_8], %14 {strides = array<i32>} : memref<2x1024xf32, #tpu.memory_space<vmem>>, vector<2x1024xf32>,
    %c0_i32_9 = arith.constant 0 : i32
    %16 = arith.cmpi eq, %arg1, %c0_i32_9 : i32
    %17 = arith.extui %16 : i1 to i32
    %c0_i32_10 = arith.constant 0 : i32
    %18 = arith.cmpi ne, %17, %c0_i32_10 : i32
    scf.if %18 {
      %c0_11 = arith.constant 0 : index
      %c0_12 = arith.constant 0 : index
      %19 = vector.load %arg5[%c0_11, %c0_12] : memref<2x1024xf32, #tpu.memory_space<vmem>>, vector<2x1024xf32>
      %cst_13 = arith.constant dense<0.000000e+00> : vector<2xf32>
      %20 = vector.multi_reduction <add>, %19, %cst_13 [1] : vector<2x1024xf32> to vector<2xf32>
      %21 = vector.shape_cast %20 : vector<2xf32> to vector<2x1xf32>
      %cst_14 = arith.constant 9.765625E-4 : f32
      %22 = vector.broadcast %cst_14 : f32 to vector<2x1xf32>
      %23 = arith.mulf %21, %22 : vector<2x1xf32>
      %c0_15 = arith.constant 0 : index
      %c0_16 = arith.constant 0 : index
      %24 = vector.load %arg4[%c0_15, %c0_16] : memref<2x1xf32, #tpu.memory_space<vmem>>, vector<2x1xf32>
      tpu.vector_store %arg4[%c0_15, %c0_16], %23 {strides = array<i32>} : memref<2x1xf32, #tpu.memory_space<vmem>>, vector<2x1xf32>,
    } else {
    }
    return
  }
  func.func @transform_0(%arg0: i32, %arg1: i32) -> (i32, i32) {
    %c0_i32 = arith.constant 0 : i32
    return %arg0, %arg1 : i32, i32
  }
  func.func @transform_1(%arg0: i32, %arg1: i32) -> (i32, i32) {
    %c0_i32 = arith.constant 0 : i32
    return %arg0, %arg1 : i32, i32
  }
  func.func @transform_2(%arg0: i32, %arg1: i32) -> (i32, i32) {
    %c0_i32 = arith.constant 0 : i32
    %c0_i32_0 = arith.constant 0 : i32
    return %arg0, %c0_i32 : i32, i32
  }
}

</mosaic_0001>

<llo_original>
// kernel: tpu_custom_call.1
$region0: #{tpu_custom_call.1}
  #allocation0 [shape = 'u32[]', space=smem, size = 0x4, offset = 0x4, fixed_abs, tag = 'smem constant byte address 0x4 - core index']
  #allocation1 [shape = 'u32[144,128]{1,0:T(1,128)}', space=vmem, size = 0x12000, scoped, tag = 'internal scratch']
  #allocation2 [shape = 'f32[2,1024]{1,0:T(2,128)}', space=vmem, size = 0x2000, scoped, tag = 'scratch operand']
  %s0 = inlined_call_operand.hbm [shape: f32[2,1024], index: 0, kind: input, shape index: {}]
  %s1 = inlined_call_operand.hbm [shape: f32[2,1024], index: 1, kind: input, shape index: {}]
  %s2 = inlined_call_operand.vmem [shape: f32[2,1], index: 2, kind: output, shape index: {}]
  %s3 = sld [smem:[#allocation0]]
  $region34: #{tpu_custom_call.1} parent=0
    _
  %s5 = ssub.s32 1, %s3
  %s6 = scalar_select 0, %s5, %s3
  $region1: #{tpu_custom_call.1} parent=0
    #allocation3 [shape = 'u8[8192]{0}', space=vmem, size = 0x2000, scoped, tag = 'input window, operand 0, single buffered']
    #allocation4 [shape = 's32[1]{0}', space=sflag, size = 0x4, scoped, tag = 'scoped memory for tpu_custom_call.1']
    #allocation5 [shape = 'u8[8192]{0}', space=vmem, size = 0x2000, scoped, tag = 'input window, operand 1, single buffered']
    #allocation6 [shape = 's32[1]{0}', space=sflag, size = 0x4, scoped, tag = 'scoped memory for tpu_custom_call.1']
    %7 = vsyncpa [#allocation4], 0
    %8 = vsyncpa [#allocation6], 0
    // Predicated region
    $region2: #{tpu_custom_call.1} parent=1 // pred_check
      _
    $region3: #{tpu_custom_call.1} parent=1 // pred_check_branch
      %10 = sbr.rel (0) target = $region5
    $region4: #{tpu_custom_call.1} parent=1 // pred_region
      %s12 = ssub.s32 256, 256
      %13 = vsyncadd [#allocation4], %s12
      %s15 = sshll.u32 [#allocation3], 4
      %s16 = int_to_ptr.vmem [resolvable:$true] %s15
      %18 = dma.hbm_to_vmem [thread:$0]  %s0, 256, %s16, [#allocation4]
    $region5: #{tpu_custom_call.1} parent=1 // pred_fallthru
      _
    // Predicated region
    $region6: #{tpu_custom_call.1} parent=1 // pred_check
      _
    $region7: #{tpu_custom_call.1} parent=1 // pred_check_branch
      %20 = sbr.rel (0) target = $region9
    $region8: #{tpu_custom_call.1} parent=1 // pred_region
      %s22 = ssub.s32 256, 256
      %23 = vsyncadd [#allocation6], %s22
      %s25 = sshll.u32 [#allocation5], 4
      %s26 = int_to_ptr.vmem [resolvable:$true] %s25
      %28 = dma.hbm_to_vmem [thread:$0]  %s1, 256, %s26, [#allocation6]
    $region9: #{tpu_custom_call.1} parent=1 // pred_fallthru
      _
    // Predicated region
    $region10: #{tpu_custom_call.1} parent=1 // pred_check
      _
    $region11: #{tpu_custom_call.1} parent=1 // pred_check_branch
      %30 = sbr.rel (0) target = $region13
    $region12: #{tpu_custom_call.1} parent=1 // pred_region
      %31 = dma.done [#allocation4], 256
    $region13: #{tpu_custom_call.1} parent=1 // pred_fallthru
      _
    // Predicated region
    $region14: #{tpu_custom_call.1} parent=1 // pred_check
      _
    $region15: #{tpu_custom_call.1} parent=1 // pred_check_branch
      %33 = sbr.rel (0) target = $region17
    $region16: #{tpu_custom_call.1} parent=1 // pred_region
      %34 = dma.done [#allocation6], 256
    $region17: #{tpu_custom_call.1} parent=1 // pred_fallthru
      _
    %p35 = scmp.eq.s32.totalorder 0, 0
    // Predicated region
    $region18: #{tpu_custom_call.1} parent=1 // pred_check
      %p36 = pneg %p35
    $region19: #{tpu_custom_call.1} parent=1 // pred_check_branch
      %38 = sbr.rel (%p36) target = $region21
    $region20: #{tpu_custom_call.1} parent=1 // pred_region
      %39 = vst [vmem:[#allocation2] sm:$0xff] 0.0
      %40 = vst [vmem:[#allocation2 + $0x8] sm:$0xff] 0.0
    $region21: #{tpu_custom_call.1} parent=1 // pred_fallthru
      _
    %v41 = vld [vmem:[#allocation3] sm:$0xff]
    %v42 = vld [vmem:[#allocation3 + $0x8] sm:$0xff]
    %v43 = vld [vmem:[#allocation5] sm:$0xff]
    %v44 = vld [vmem:[#allocation5 + $0x8] sm:$0xff]
    %v45 = vmul.f32 %v43, 1.442695
    %v46 = vpow.pop %v45
    %v47 = vmul.f32 %v44, 1.442695
    %v48 = vpow.pop %v47
    %v49 = vadd.f32 %v43, 1.0
    %v50 = vadd.f32 %v44, 1.0
    %v51 = vmul.f32 %v41, %v41
    %v52 = vmul.f32 %v42, %v42
    %v53 = vsub.f32 %v49, %v51
    %v54 = vsub.f32 %v50, %v52
    %v55 = vsub.f32 %v53, %v46
    %v56 = vsub.f32 %v54, %v48
    %v57 = vmul.f32 %v55, -0.5
    %v58 = vmul.f32 %v56, -0.5
    %v59 = vld [vmem:[#allocation2] sm:$0xff]
    %v60 = vld [vmem:[#allocation2 + $0x8] sm:$0xff]
    %v61 = vadd.f32 %v59, %v57
    %v62 = vadd.f32 %v60, %v58
    %63 = vst [vmem:[#allocation2] sm:$0xff] %v61
    %64 = vst [vmem:[#allocation2 + $0x8] sm:$0xff] %v62
    // Predicated region
    $region22: #{tpu_custom_call.1} parent=1 // pred_check
      %p65 = pneg %p35
    $region23: #{tpu_custom_call.1} parent=1 // pred_check_branch
      %67 = sbr.rel (%p65) target = $region25
    $region24: #{tpu_custom_call.1} parent=1 // pred_region
      %v68 = vld [vmem:[#allocation2] sm:$0xff]
      %v69 = vld [vmem:[#allocation2 + $0x8] sm:$0xff]
      %v72 = vcombine.high %v68, %v68
      %v74 = vunpack.c.l.s4 1983009808
      %v75 = vunpack.c.0.s8 %v74
      %v76 = vlaneseq
      %v77 = vshrl.u32 %v76, 7
      %v78 = vsub.s32 %v75, %v77
      %v79 = vrot.slane %v68, %v78
      %v81 = vunpack.c.l.s4 1983009808
      %v82 = vunpack.c.0.s8 %v81
      %v83 = vlaneseq
      %v84 = vshrl.u32 %v83, 7
      %v85 = vsub.s32 %v82, %v84
      %v86 = vrot.slane %v72, %v85
      %v87 = vcombine.high %v79, %v79
      %v88 = vcombine.high %v86, %v86
      %v89 = vcombine.high %v69, %v69
      %v91 = vunpack.c.l.s4 1983009808
      %v92 = vunpack.c.0.s8 %v91
      %v93 = vlaneseq
      %v94 = vshrl.u32 %v93, 7
      %v95 = vsub.s32 %v92, %v94
      %v96 = vrot.slane %v69, %v95
      %v98 = vunpack.c.l.s4 1983009808
      %v99 = vunpack.c.0.s8 %v98
      %v100 = vlaneseq
      %v101 = vshrl.u32 %v100, 7
      %v102 = vsub.s32 %v99, %v101
      %v103 = vrot.slane %v89, %v102
      %v104 = vcombine.high %v96, %v96
      %v105 = vcombine.high %v103, %v103
      %vm114 = vcmask 1041408
      %v115 = vsel %vm114, %v79, 0.0
      %v116 = vsel %vm114, %v87, 0.0
      %v117 = vadd.f32 %v115, %v116
      %v118 = vsel %vm114, %v86, 0.0
      %v119 = vadd.f32 %v117, %v118
      %v120 = vsel %vm114, %v88, 0.0
      %v121 = vadd.f32 %v119, %v120
      %v122 = vsel %vm114, %v96, 0.0
      %v123 = vadd.f32 %v121, %v122
      %v124 = vsel %vm114, %v104, 0.0
      %v125 = vadd.f32 %v123, %v124
      %v126 = vsel %vm114, %v103, 0.0
      %v127 = vadd.f32 %v125, %v126
      %v128 = vsel %vm114, %v105, 0.0
      %v129 = vadd.f32 %v127, %v128
      %130 = vadd.xlane.f32.xlu0 %v129
      %v131 = vpop.xlane.xlu0 %130
      %v132 = vmul.f32 %v131, 0.0009765625
      %vm133 = vcmask 1024
      %134 = vst.msk [vmem:[%s2] sm:$0x3] %vm133, %v132
    $region25: #{tpu_custom_call.1} parent=1 // pred_fallthru
      _
    // Predicated region
    $region26: #{tpu_custom_call.1} parent=1 // pred_check
      _
    $region27: #{tpu_custom_call.1} parent=1 // pred_check_branch
      %136 = sbr.rel (0) target = $region29
    $region28: #{tpu_custom_call.1} parent=1 // pred_region
      _
    $region29: #{tpu_custom_call.1} parent=1 // pred_fallthru
      _
    // Predicated region
    $region30: #{tpu_custom_call.1} parent=1 // pred_check
      _
    $region31: #{tpu_custom_call.1} parent=1 // pred_check_branch
      %138 = sbr.rel (0) target = $region33
    $region32: #{tpu_custom_call.1} parent=1 // pred_region
      _
    $region33: #{tpu_custom_call.1} parent=1 // pred_fallthru
      _
    %139 = vsyncpa [#allocation4], 1
    %140 = vsyncpa [#allocation6], 1

</llo_original>
